<compile_context>
chip_gen: v7x
topology: tpu7x:2x2x1
jax: 0.10.0
libtpu: 0.0.40
codegen_flags: <defaults>
</compile_context>

<pallas_src>
import functools

import jax
import jax.numpy as jnp
from jax.experimental import pallas as pl
from jax.experimental.pallas import tpu as pltpu

LANE = 128     # TPU vreg lane width
SUBLANE = 8    # f32 sublane count


def multin_kernel(y_ref, lr_ref, o_ref, *, factor):
    # o = y * lr * factor  -- single fused elementwise pass on full, lane-dense tiles.
    o_ref[...] = y_ref[...] * lr_ref[...] * factor


def mult_in(y, lr, factor, *, block_rows=1024, lane_width=512):
    """Pallas MultIn forward: y * lr * factor (lr broadcast to y's shape)."""
    lr = jnp.broadcast_to(jnp.asarray(lr, dtype=y.dtype), y.shape)
    orig_shape = y.shape
    dtype = y.dtype
    n = y.size

    # Flatten to a lane-dense 2-D slab: last dim = lane_width (multiple of 128),
    # rows padded so every tile is a full (block_rows, lane_width) block
    # -> unmasked vld / vst, no partial stores.
    assert lane_width % LANE == 0
    rows_needed = pl.cdiv(n, lane_width)
    br = min(block_rows, ((rows_needed + SUBLANE - 1) // SUBLANE) * SUBLANE)
    br = ((br + SUBLANE - 1) // SUBLANE) * SUBLANE
    chunk = br * lane_width
    total = pl.cdiv(n, chunk) * chunk
    pad = total - n

    yf = jnp.ravel(y)
    lf = jnp.ravel(lr)
    if pad:
        zeros = jnp.zeros((pad,), dtype)
        yf = jnp.concatenate([yf, zeros])
        lf = jnp.concatenate([lf, zeros])
    rows = total // lane_width
    y2 = yf.reshape(rows, lane_width)
    l2 = lf.reshape(rows, lane_width)

    grid = (rows // br,)
    out2 = pl.pallas_call(
        functools.partial(multin_kernel, factor=float(factor)),
        out_shape=jax.ShapeDtypeStruct((rows, lane_width), dtype),
        grid_spec=pltpu.PrefetchScalarGridSpec(
            num_scalar_prefetch=0,
            grid=grid,
            in_specs=[
                pl.BlockSpec((br, lane_width), lambda i: (i, 0)),
                pl.BlockSpec((br, lane_width), lambda i: (i, 0)),
            ],
            out_specs=pl.BlockSpec((br, lane_width), lambda i: (i, 0)),
        ),
        compiler_params=pltpu.CompilerParams(
            dimension_semantics=("parallel",),
        ),
        cost_estimate=pl.CostEstimate(
            flops=2 * n,                                   # two multiplies per element
            transcendentals=0,
            bytes_accessed=3 * n * jnp.dtype(dtype).itemsize,  # y + lr in, out
        ),
    )(y2, l2)

    return out2.reshape(-1)[:n].reshape(orig_shape)


def ref_forward(y, lr, factor):
    """Pure-JAX reference mirroring the PyTorch MultIn.forward."""
    return y * lr * factor


if __name__ == "__main__":
    key = jax.random.PRNGKey(0)
    ky, kl = jax.random.split(key)

    factor = 0.5
    y = jax.random.normal(ky, (2, 4, 16, 16), dtype=jnp.float32)
    lr = jax.random.normal(kl, (2, 4, 16, 16), dtype=jnp.float32)

    out = mult_in(y, lr, factor)
    out = jax.block_until_ready(out)

    ref = ref_forward(y, lr, factor)
    err = float(jnp.max(jnp.abs(out - ref)))
    if not jnp.allclose(out, ref, atol=1e-6, rtol=1e-6):
        raise AssertionError(f"Pallas kernel mismatch vs reference, max abs err = {err}")

    print("KERNEL_OK")
</pallas_src>

<mosaic_0001>
module attributes {stable_mosaic.version = 11 : i64} {
  func.func @multin_kernel(%arg0: i32, %arg1: memref<8x512xf32, #tpu.memory_space<vmem>>, %arg2: memref<8x512xf32, #tpu.memory_space<vmem>>, %arg3: memref<8x512xf32, #tpu.memory_space<vmem>>) attributes {dimension_semantics = [#tpu.dimension_semantics<parallel>], iteration_bounds = array<i64: 1>, scalar_prefetch = 0 : i64, scratch_operands = 0 : i64, tpu.core_type = #tpu.core_type<tc>, window_params = [{transform_indices = @transform_0, window_bounds = array<i64: 8, 512>}, {transform_indices = @transform_1, window_bounds = array<i64: 8, 512>}, {transform_indices = @transform_2, window_bounds = array<i64: 8, 512>}]} {
    %c0 = arith.constant 0 : index
    %c0_0 = arith.constant 0 : index
    %0 = vector.load %arg1[%c0, %c0_0] : memref<8x512xf32, #tpu.memory_space<vmem>>, vector<8x512xf32>
    %c0_1 = arith.constant 0 : index
    %c0_2 = arith.constant 0 : index
    %1 = vector.load %arg2[%c0_1, %c0_2] : memref<8x512xf32, #tpu.memory_space<vmem>>, vector<8x512xf32>
    %2 = arith.mulf %0, %1 : vector<8x512xf32>
    %cst = arith.constant 5.000000e-01 : f32
    %3 = vector.broadcast %cst : f32 to vector<8x512xf32>
    %4 = arith.mulf %2, %3 : vector<8x512xf32>
    %c0_3 = arith.constant 0 : index
    %c0_4 = arith.constant 0 : index
    %5 = vector.load %arg3[%c0_3, %c0_4] : memref<8x512xf32, #tpu.memory_space<vmem>>, vector<8x512xf32>
    tpu.vector_store %arg3[%c0_3, %c0_4], %4 {strides = array<i32>} : memref<8x512xf32, #tpu.memory_space<vmem>>, vector<8x512xf32>,
    return
  }
  func.func @transform_0(%arg0: i32) -> (i32, i32) {
    %c0_i32 = arith.constant 0 : i32
    %c0_i32_0 = arith.constant 0 : i32
    return %arg0, %c0_i32 : i32, i32
  }
  func.func @transform_1(%arg0: i32) -> (i32, i32) {
    %c0_i32 = arith.constant 0 : i32
    %c0_i32_0 = arith.constant 0 : i32
    return %arg0, %c0_i32 : i32, i32
  }
  func.func @transform_2(%arg0: i32) -> (i32, i32) {
    %c0_i32 = arith.constant 0 : i32
    %c0_i32_0 = arith.constant 0 : i32
    return %arg0, %c0_i32 : i32, i32
  }
}

</mosaic_0001>

<llo_original>
// kernel: tpu_custom_call.1
$region0: #{tpu_custom_call.1}
  #allocation0 [shape = 'u32[]', space=smem, size = 0x4, offset = 0x4, fixed_abs, tag = 'smem constant byte address 0x4 - core index']
  #allocation1 [shape = 'u32[144,128]{1,0:T(1,128)}', space=vmem, size = 0x12000, scoped, tag = 'internal scratch']
  %s0 = inlined_call_operand.hbm [shape: f32[8,512], index: 0, kind: input, shape index: {}]
  %s1 = inlined_call_operand.hbm [shape: f32[8,512], index: 1, kind: input, shape index: {}]
  %s2 = inlined_call_operand.hbm [shape: f32[8,512], index: 2, kind: output, shape index: {}]
  %s3 = sld [smem:[#allocation0]]
  $region26: #{tpu_custom_call.1} parent=0
    _
  %s5 = ssub.s32 1, %s3
  %s6 = scalar_select 0, %s5, %s3
  $region1: #{tpu_custom_call.1} parent=0
    #allocation2 [shape = 'u8[16384]{0}', space=vmem, size = 0x4000, scoped, tag = 'input window, operand 0, single buffered']
    #allocation3 [shape = 's32[1]{0}', space=sflag, size = 0x4, scoped, tag = 'scoped memory for tpu_custom_call.1']
    #allocation4 [shape = 's32[1]{0}', space=sflag, size = 0x4, scoped, tag = 'scoped memory for tpu_custom_call.1']
    #allocation5 [shape = 'u8[16384]{0}', space=vmem, size = 0x4000, scoped, tag = 'input window, operand 1, single buffered']
    #allocation6 [shape = 's32[1]{0}', space=sflag, size = 0x4, scoped, tag = 'scoped memory for tpu_custom_call.1']
    #allocation7 [shape = 'u8[16384]{0}', space=vmem, size = 0x4000, scoped, tag = 'output window, operand 0, single buffered']
    %7 = vsyncpa [#allocation3], 0
    %8 = vsyncpa [#allocation6], 0
    %9 = vsyncpa [#allocation4], 0
    // Predicated region
    $region2: #{tpu_custom_call.1} parent=1 // pred_check
      _
    $region3: #{tpu_custom_call.1} parent=1 // pred_check_branch
      %11 = sbr.rel (0) target = $region5
    $region4: #{tpu_custom_call.1} parent=1 // pred_region
      %s13 = ssub.s32 512, 512
      %14 = vsyncadd [#allocation3], %s13
      %s16 = sshll.u32 [#allocation2], 4
      %s17 = int_to_ptr.vmem [resolvable:$true] %s16
      %19 = dma.hbm_to_vmem [thread:$0]  %s0, 512, %s17, [#allocation3]
    $region5: #{tpu_custom_call.1} parent=1 // pred_fallthru
      _
    // Predicated region
    $region6: #{tpu_custom_call.1} parent=1 // pred_check
      _
    $region7: #{tpu_custom_call.1} parent=1 // pred_check_branch
      %21 = sbr.rel (0) target = $region9
    $region8: #{tpu_custom_call.1} parent=1 // pred_region
      %s23 = ssub.s32 512, 512
      %24 = vsyncadd [#allocation6], %s23
      %s26 = sshll.u32 [#allocation5], 4
      %s27 = int_to_ptr.vmem [resolvable:$true] %s26
      %29 = dma.hbm_to_vmem [thread:$0]  %s1, 512, %s27, [#allocation6]
    $region9: #{tpu_custom_call.1} parent=1 // pred_fallthru
      _
    // Predicated region
    $region10: #{tpu_custom_call.1} parent=1 // pred_check
      _
    $region11: #{tpu_custom_call.1} parent=1 // pred_check_branch
      %31 = sbr.rel (0) target = $region13
    $region12: #{tpu_custom_call.1} parent=1 // pred_region
      %32 = dma.done [#allocation3], 512
    $region13: #{tpu_custom_call.1} parent=1 // pred_fallthru
      _
    // Predicated region
    $region14: #{tpu_custom_call.1} parent=1 // pred_check
      _
    $region15: #{tpu_custom_call.1} parent=1 // pred_check_branch
      %34 = sbr.rel (0) target = $region17
    $region16: #{tpu_custom_call.1} parent=1 // pred_region
      %35 = dma.done [#allocation6], 512
    $region17: #{tpu_custom_call.1} parent=1 // pred_fallthru
      _
    %v36 = vld [vmem:[#allocation2] sm:$0xff]
    %v37 = vld [vmem:[#allocation2 + $0x8] sm:$0xff]
    %v38 = vld [vmem:[#allocation2 + $0x10] sm:$0xff]
    %v39 = vld [vmem:[#allocation2 + $0x18] sm:$0xff]
    %v40 = vld [vmem:[#allocation5] sm:$0xff]
    %v41 = vld [vmem:[#allocation5 + $0x8] sm:$0xff]
    %v42 = vld [vmem:[#allocation5 + $0x10] sm:$0xff]
    %v43 = vld [vmem:[#allocation5 + $0x18] sm:$0xff]
    %v44 = vmul.f32 %v36, %v40
    %v45 = vmul.f32 %v37, %v41
    %v46 = vmul.f32 %v38, %v42
    %v47 = vmul.f32 %v39, %v43
    %v48 = vmul.f32 %v44, 0.5
    %v49 = vmul.f32 %v45, 0.5
    %v50 = vmul.f32 %v46, 0.5
    %v51 = vmul.f32 %v47, 0.5
    %52 = vst [vmem:[#allocation7] sm:$0xff] %v48
    %53 = vst [vmem:[#allocation7 + $0x8] sm:$0xff] %v49
    %54 = vst [vmem:[#allocation7 + $0x10] sm:$0xff] %v50
    %55 = vst [vmem:[#allocation7 + $0x18] sm:$0xff] %v51
    // Predicated region
    $region18: #{tpu_custom_call.1} parent=1 // pred_check
      _
    $region19: #{tpu_custom_call.1} parent=1 // pred_check_branch
      %57 = sbr.rel (0) target = $region21
    $region20: #{tpu_custom_call.1} parent=1 // pred_region
      %s59 = ssub.s32 512, 512
      %60 = vsyncadd [#allocation4], %s59
      %s62 = sshll.u32 [#allocation7], 4
      %s63 = int_to_ptr.vmem [resolvable:$true] %s62
      %65 = dma.vmem_to_hbm [thread:$0]  %s63, 512, %s2, [#allocation4]
    $region21: #{tpu_custom_call.1} parent=1 // pred_fallthru
      _
    // Predicated region
    $region22: #{tpu_custom_call.1} parent=1 // pred_check
      _
    $region23: #{tpu_custom_call.1} parent=1 // pred_check_branch
      %67 = sbr.rel (0) target = $region25
    $region24: #{tpu_custom_call.1} parent=1 // pred_region
      %68 = dma.done [#allocation4], 512
    $region25: #{tpu_custom_call.1} parent=1 // pred_fallthru
      _
    %69 = vsyncpa [#allocation3], 1
    %70 = vsyncpa [#allocation6], 1
    %71 = vsyncpa [#allocation4], 1

</llo_original>
